<compile_context>
chip_gen: v5e
topology: v5e:2x2
jax: 0.10.0
libtpu: 0.0.40
codegen_flags: <defaults>
</compile_context>

<pallas_src>
import jax
import jax.numpy as jnp
from jax.experimental import pallas as pl
from jax.experimental.pallas import tpu as pltpu


def _bahdanau_decode_kernel(
    emb_ref,     # (1, 1, O)   f32  embedded token for this step (block of (T,1,O) slab)
    h0_ref,      # (1, H)      f32  initial hidden state (step 0 only)
    c0_ref,      # (1, H)      f32  initial cell state   (step 0 only)
    enc_ref,     # (S, H)      f32  encoder outputs (VMEM-resident, constant index)
    fce_ref,     # (S, H)      f32  precomputed fc_encoder(enc) (step-invariant)
    wh_ref,      # (H, H)      f32  fc_hidden.weight^T
    v_ref,       # (1, H)      f32  attention vector
    wlstm_ref,   # (O+2H, 4H)  f32  fused [w_ih^T ; w_hh^T]
    b_ref,       # (1, 4H)     f32  b_ih + b_hh
    wcls_ref,    # (H, O)      f32  classifier.weight^T
    bcls_ref,    # (1, O)      f32  classifier.bias
    out_ref,     # (1, 1, O)   f32  classifier output for this step
    attn_ref,    # (1, 1, S)   f32  attention weights for this step (lane-dense)
    hn_ref,      # (1, H)      f32  final hidden state (written at last step)
    cn_ref,      # (1, H)      f32  final cell state   (written at last step)
    h_scr,       # (1, H)      f32  VMEM scratch: recurrent h, persists across grid
    c_scr,       # (1, H)      f32  VMEM scratch: recurrent c, persists across grid
):
    t = pl.program_id(0)
    H = h0_ref.shape[1]

    # seed the recurrent state from the caller-provided hidden on the first step
    @pl.when(t == 0)
    def _():
        h_scr[...] = h0_ref[...]
        c_scr[...] = c0_ref[...]

    emb = emb_ref[0]          # (1, O)
    h_prev = h_scr[...]       # (1, H)
    c_prev = c_scr[...]       # (1, H)
    enc = enc_ref[...]        # (S, H)

    # ---- Bahdanau attention (fc_encoder(enc) precomputed, step-invariant) ----
    fc_h = jnp.dot(h_prev, wh_ref[...], preferred_element_type=jnp.float32)   # (1, H)
    x = jnp.tanh(fc_h + fce_ref[...])                                         # (S, H)

    # lane-dense alignment scores: v . x^T (contract over H) -> (1, S)
    scores = jax.lax.dot_general(
        v_ref[...], x, (((1,), (1,)), ((), ())),
        preferred_element_type=jnp.float32)                                   # (1, S)

    # softmax over the sequence axis (lane reduce), f32
    m = jnp.max(scores, axis=1, keepdims=True)
    e = jnp.exp(scores - m)
    attn = e * pl.reciprocal(jnp.sum(e, axis=1, keepdims=True), approx=True)  # (1, S)
    attn_ref[0] = attn

    # context vector: attn @ enc -> (1, H)
    context = jnp.dot(attn, enc, preferred_element_type=jnp.float32)

    # ---- single LSTM step, one fused gate matmul ----------------------------
    # lstm_in = [embedded | context | h_prev] matches fused rows [w_ih^T ; w_hh^T]
    lstm_in = jnp.concatenate([emb, context, h_prev], axis=1)                 # (1, O+2H)
    gates = (
        jnp.dot(lstm_in, wlstm_ref[...], preferred_element_type=jnp.float32)
        + b_ref[...]
    )                                                                         # (1, 4H)

    # full-width nonlinearities (one sigmoid pass + one tanh pass), then slice
    sig_all = jax.nn.sigmoid(gates)
    tanh_all = jnp.tanh(gates)
    i_g = sig_all[:, 0 * H:1 * H]
    f_g = sig_all[:, 1 * H:2 * H]
    g_g = tanh_all[:, 2 * H:3 * H]
    o_g = sig_all[:, 3 * H:4 * H]

    c_new = f_g * c_prev + i_g * g_g
    h_new = o_g * jnp.tanh(c_new)
    h_scr[...] = h_new
    c_scr[...] = c_new

    # ---- classifier ----------------------------------------------------------
    out_ref[0] = (
        jnp.dot(h_new, wcls_ref[...], preferred_element_type=jnp.float32)
        + bcls_ref[...]
    )

    # write the final recurrent state out only once, on the last step
    @pl.when(t == pl.num_programs(0) - 1)
    def _():
        hn_ref[...] = h_new
        cn_ref[...] = c_new


def prepare_params(params):
    """One-time parameter preprocessing (hoisted out of the per-step path).

    Transposes, fuses [w_ih^T ; w_hh^T] and sums the LSTM biases. All weights stay
    f32: the matrices are tiny, the kernel is latency-bound, and f32 gives tighter
    parity with the PyTorch reference than bf16.
    """
    H = params["fc_hidden_w"].shape[0]
    O = params["cls_w"].shape[0]
    w_ih_t = params["lstm_w_ih"].T                      # (O+H, 4H): rows = [emb | ctx]
    w_hh_t = params["lstm_w_hh"].T                      # (H, 4H)
    w_lstm = jnp.concatenate([w_ih_t, w_hh_t], axis=0)  # (O+2H, 4H)
    return {
        "wh_t": params["fc_hidden_w"].T.astype(jnp.float32),        # (H, H)
        "we_t": params["fc_encoder_w"].T.astype(jnp.float32),       # (H, H)  (XLA only)
        "v": params["attn_v"].astype(jnp.float32),                  # (1, H)
        "w_lstm": w_lstm.astype(jnp.float32),                       # (O+2H, 4H)
        "b_lstm": (params["lstm_b_ih"] + params["lstm_b_hh"]
                   ).reshape(1, 4 * H).astype(jnp.float32),         # (1, 4H)
        "wcls_t": params["cls_w"].T.astype(jnp.float32),            # (H, O)
        "bcls": params["cls_b"].reshape(1, O).astype(jnp.float32),  # (1, O)
    }


def bahdanau_decoder_decode(token_slab, hidden, encoder_outputs, prepped):
    """Run T teacher-forced decode steps in ONE pallas_call.

    token_slab: (T, O) embedded decoder inputs (one row per decode step).
    Returns (outputs (T, O), (h (1,1,H), c (1,1,H)), attn_weights (T, S)).
    Each step reproduces BahdanauDecoder.forward applied sequentially.
    """
    H = prepped["wh_t"].shape[0]
    O = prepped["wcls_t"].shape[1]
    T = token_slab.shape[0]

    emb = token_slab.reshape(T, 1, O).astype(jnp.float32)
    # TODO(synk): nn.Dropout(p=0.1) on `embedded` treated as identity (inference mode).
    h0 = hidden[0].reshape(1, H).astype(jnp.float32)
    c0 = hidden[1].reshape(1, H).astype(jnp.float32)
    # explicit reshape instead of squeeze(): safe even when S == 1
    enc = encoder_outputs.reshape(-1, H).astype(jnp.float32)     # (S, H)
    S = enc.shape[0]

    # step-invariant fc_encoder projection: computed ONCE per sequence in XLA,
    # removed from the per-step critical path (and we_t never enters the kernel).
    fc_e = jnp.dot(enc, prepped["we_t"])                          # (S, H) f32

    kernel_inputs = (
        emb, h0, c0, enc, fc_e,
        prepped["wh_t"], prepped["v"], prepped["w_lstm"],
        prepped["b_lstm"], prepped["wcls_t"], prepped["bcls"],
    )

    def const2d(shape):
        # whole-array block with a constant index_map -> stays VMEM-resident
        # across all T grid steps (no per-step re-DMA of weights/encoder).
        return pl.BlockSpec(shape, lambda t: (0, 0))

    in_specs = [pl.BlockSpec((1, 1, O), lambda t: (t, 0, 0))] + [
        const2d(a.shape) for a in kernel_inputs[1:]
    ]

    out_shapes = (
        jax.ShapeDtypeStruct((T, 1, O), jnp.float32),   # classifier outputs per step
        jax.ShapeDtypeStruct((T, 1, S), jnp.float32),   # attention weights per step
        jax.ShapeDtypeStruct((1, H), jnp.float32),      # final h
        jax.ShapeDtypeStruct((1, H), jnp.float32),      # final c
    )
    out_specs = (
        pl.BlockSpec((1, 1, O), lambda t: (t, 0, 0)),
        pl.BlockSpec((1, 1, S), lambda t: (t, 0, 0)),
        const2d((1, H)),
        const2d((1, H)),
    )

    outs, attn, h_new, c_new = pl.pallas_call(
        _bahdanau_decode_kernel,
        grid=(T,),
        in_specs=in_specs,
        out_specs=out_specs,
        out_shape=out_shapes,
        scratch_shapes=[pltpu.VMEM((1, H), jnp.float32),   # recurrent h carry
                        pltpu.VMEM((1, H), jnp.float32)],  # recurrent c carry
        compiler_params=pltpu.CompilerParams(
            dimension_semantics=("arbitrary",)),            # sequential recurrence
    )(*kernel_inputs)

    return (outs.reshape(T, O),
            (h_new.reshape(1, 1, H), c_new.reshape(1, 1, H)),
            attn.reshape(T, S))


def bahdanau_decoder_step(inputs, hidden, encoder_outputs, prepped):
    """Single-step API mirroring BahdanauDecoder.forward exactly (T == 1)."""
    out, hid, attn = bahdanau_decoder_decode(
        inputs.reshape(1, -1), hidden, encoder_outputs, prepped)
    return out, hid, attn


def _ref_forward(inputs, hidden, encoder_outputs, params):
    """Pure-JAX (f32) reference mirroring the PyTorch forward (dropout == identity)."""
    H = params["fc_hidden_w"].shape[0]
    emb = inputs.reshape(1, -1)
    enc = encoder_outputs.reshape(-1, H)
    h0 = hidden[0].reshape(1, H)
    c0 = hidden[1].reshape(1, H)

    x = jnp.tanh(h0 @ params["fc_hidden_w"].T + enc @ params["fc_encoder_w"].T)
    scores = x @ params["attn_v"].T                       # (S, 1)
    attn = jax.nn.softmax(scores.reshape(1, -1), axis=1)  # (1, S)
    ctx = attn @ enc                                      # (1, H)

    lstm_in = jnp.concatenate([emb, ctx], axis=1)
    gates = (lstm_in @ params["lstm_w_ih"].T + params["lstm_b_ih"]
             + h0 @ params["lstm_w_hh"].T + params["lstm_b_hh"])
    i_g = jax.nn.sigmoid(gates[:, 0 * H:1 * H])
    f_g = jax.nn.sigmoid(gates[:, 1 * H:2 * H])
    g_g = jnp.tanh(gates[:, 2 * H:3 * H])
    o_g = jax.nn.sigmoid(gates[:, 3 * H:4 * H])
    c_new = f_g * c0 + i_g * g_g
    h_new = o_g * jnp.tanh(c_new)
    out = h_new @ params["cls_w"].T + params["cls_b"]
    return out, (h_new.reshape(1, 1, H), c_new.reshape(1, 1, H)), attn


def _init_params(key, hidden_size, output_size):
    H, O = hidden_size, output_size
    ks = jax.random.split(key, 9)
    u = lambda k, shape, s: jax.random.uniform(k, shape, jnp.float32, -s, s)
    lim_h = 1.0 / jnp.sqrt(H)
    return {
        "fc_hidden_w": u(ks[0], (H, H), lim_h),
        "fc_encoder_w": u(ks[1], (H, H), lim_h),
        "attn_v": u(ks[2], (1, H), lim_h),
        "lstm_w_ih": u(ks[3], (4 * H, H + O), lim_h),
        "lstm_w_hh": u(ks[4], (4 * H, H), lim_h),
        "lstm_b_ih": u(ks[5], (4 * H,), lim_h),
        "lstm_b_hh": u(ks[6], (4 * H,), lim_h),
        "cls_w": u(ks[7], (O, H), lim_h),
        "cls_b": u(ks[8], (O,), lim_h),
    }


if __name__ == "__main__":
    H, O, S, T = 32, 16, 8, 6   # hidden, output (== embed) size, enc seq len, decode steps

    key = jax.random.PRNGKey(0)
    k_par, k_tok, k_h, k_c, k_enc = jax.random.split(key, 5)

    params = _init_params(k_par, H, O)
    prepped = prepare_params(params)          # one-time weight prep (hoisted)

    tokens = jax.random.normal(k_tok, (T, O), jnp.float32)           # teacher-forced embeds
    hidden = (
        jax.random.normal(k_h, (1, 1, H), jnp.float32),              # h0
        jax.random.normal(k_c, (1, 1, H), jnp.float32),              # c0
    )
    encoder_outputs = jax.random.normal(k_enc, (1, S, H), jnp.float32)

    # ---- multi-step decode: T forward passes in ONE pallas_call --------------
    decode = jax.jit(bahdanau_decoder_decode)
    outs, (h_new, c_new), attn = decode(tokens, hidden, encoder_outputs, prepped)
    jax.block_until_ready((outs, h_new, c_new, attn))

    # reference: T sequential applications of the module's forward (pure JAX f32)
    r_hid = hidden
    r_outs, r_attns = [], []
    for t in range(T):
        r_o, r_hid, r_a = _ref_forward(tokens[t:t + 1], r_hid, encoder_outputs, params)
        r_outs.append(r_o)
        r_attns.append(r_a)
    r_outs = jnp.concatenate(r_outs, axis=0)
    r_attns = jnp.concatenate(r_attns, axis=0)

    assert outs.shape == (T, O) and attn.shape == (T, S)
    assert h_new.shape == (1, 1, H) and c_new.shape == (1, 1, H)
    assert jnp.allclose(attn, r_attns, atol=2e-2, rtol=2e-2)
    assert jnp.allclose(outs, r_outs, atol=2e-2, rtol=2e-2)
    assert jnp.allclose(h_new, r_hid[0], atol=2e-2, rtol=2e-2)
    assert jnp.allclose(c_new, r_hid[1], atol=2e-2, rtol=2e-2)

    # ---- single-step API (exact PyTorch forward signature) -------------------
    step = jax.jit(bahdanau_decoder_step)
    o1, (h1, c1), a1 = step(tokens[0:1], hidden, encoder_outputs, prepped)
    jax.block_until_ready((o1, h1, c1, a1))
    assert o1.shape == (1, O) and a1.shape == (1, S)
    assert jnp.allclose(o1, r_outs[0:1], atol=2e-2, rtol=2e-2)
    assert jnp.allclose(a1, r_attns[0:1], atol=2e-2, rtol=2e-2)

    print("KERNEL_OK")
</pallas_src>

<mosaic_0001>
module attributes {stable_mosaic.version = 11 : i64} {
  func.func @_bahdanau_decode_kernel(%arg0: i32, %arg1: memref<1x1x16xf32, #tpu.memory_space<vmem>>, %arg2: memref<1x32xf32, #tpu.memory_space<vmem>>, %arg3: memref<1x32xf32, #tpu.memory_space<vmem>>, %arg4: memref<8x32xf32, #tpu.memory_space<vmem>>, %arg5: memref<8x32xf32, #tpu.memory_space<vmem>>, %arg6: memref<32x32xf32, #tpu.memory_space<vmem>>, %arg7: memref<1x32xf32, #tpu.memory_space<vmem>>, %arg8: memref<80x128xf32, #tpu.memory_space<vmem>>, %arg9: memref<1x128xf32, #tpu.memory_space<vmem>>, %arg10: memref<32x16xf32, #tpu.memory_space<vmem>>, %arg11: memref<1x16xf32, #tpu.memory_space<vmem>>, %arg12: memref<1x1x16xf32, #tpu.memory_space<vmem>>, %arg13: memref<1x1x8xf32, #tpu.memory_space<vmem>>, %arg14: memref<1x32xf32, #tpu.memory_space<vmem>>, %arg15: memref<1x32xf32, #tpu.memory_space<vmem>>, %arg16: memref<1x32xf32, #tpu.memory_space<vmem>>, %arg17: memref<1x32xf32, #tpu.memory_space<vmem>>) attributes {dimension_semantics = [#tpu.dimension_semantics<arbitrary>], iteration_bounds = array<i64: 6>, scalar_prefetch = 0 : i64, scratch_operands = 2 : i64, tpu.core_type = #tpu.core_type<tc>, window_params = [{transform_indices = @transform_0, window_bounds = array<i64: 1, 1, 16>}, {pipeline_mode = #tpu.pipeline_mode<synchronous>, transform_indices = @transform_1, window_bounds = array<i64: 1, 32>}, {pipeline_mode = #tpu.pipeline_mode<synchronous>, transform_indices = @transform_2, window_bounds = array<i64: 1, 32>}, {pipeline_mode = #tpu.pipeline_mode<synchronous>, transform_indices = @transform_3, window_bounds = array<i64: 8, 32>}, {pipeline_mode = #tpu.pipeline_mode<synchronous>, transform_indices = @transform_4, window_bounds = array<i64: 8, 32>}, {pipeline_mode = #tpu.pipeline_mode<synchronous>, transform_indices = @transform_5, window_bounds = array<i64: 32, 32>}, {pipeline_mode = #tpu.pipeline_mode<synchronous>, transform_indices = @transform_6, window_bounds = array<i64: 1, 32>}, {pipeline_mode = #tpu.pipeline_mode<synchronous>, transform_indices = @transform_7, window_bounds = array<i64: 80, 128>}, {pipeline_mode = #tpu.pipeline_mode<synchronous>, transform_indices = @transform_8, window_bounds = array<i64: 1, 128>}, {pipeline_mode = #tpu.pipeline_mode<synchronous>, transform_indices = @transform_9, window_bounds = array<i64: 32, 16>}, {pipeline_mode = #tpu.pipeline_mode<synchronous>, transform_indices = @transform_10, window_bounds = array<i64: 1, 16>}, {transform_indices = @transform_11, window_bounds = array<i64: 1, 1, 16>}, {transform_indices = @transform_12, window_bounds = array<i64: 1, 1, 8>}, {pipeline_mode = #tpu.pipeline_mode<synchronous>, transform_indices = @transform_13, window_bounds = array<i64: 1, 32>}, {pipeline_mode = #tpu.pipeline_mode<synchronous>, transform_indices = @transform_14, window_bounds = array<i64: 1, 32>}]} {
    %c0_i32 = arith.constant 0 : i32
    %0 = arith.cmpi eq, %arg0, %c0_i32 : i32
    %1 = arith.extui %0 : i1 to i32
    %c0_i32_0 = arith.constant 0 : i32
    %2 = arith.cmpi ne, %1, %c0_i32_0 : i32
    scf.if %2 {
      %c0_41 = arith.constant 0 : index
      %c0_42 = arith.constant 0 : index
      %62 = vector.load %arg2[%c0_41, %c0_42] : memref<1x32xf32, #tpu.memory_space<vmem>>, vector<1x32xf32>
      %c0_43 = arith.constant 0 : index
      %c0_44 = arith.constant 0 : index
      %63 = vector.load %arg16[%c0_43, %c0_44] : memref<1x32xf32, #tpu.memory_space<vmem>>, vector<1x32xf32>
      tpu.vector_store %arg16[%c0_43, %c0_44], %62 {strides = array<i32>} : memref<1x32xf32, #tpu.memory_space<vmem>>, vector<1x32xf32>,
      %c0_45 = arith.constant 0 : index
      %c0_46 = arith.constant 0 : index
      %64 = vector.load %arg3[%c0_45, %c0_46] : memref<1x32xf32, #tpu.memory_space<vmem>>, vector<1x32xf32>
      %c0_47 = arith.constant 0 : index
      %c0_48 = arith.constant 0 : index
      %65 = vector.load %arg17[%c0_47, %c0_48] : memref<1x32xf32, #tpu.memory_space<vmem>>, vector<1x32xf32>
      tpu.vector_store %arg17[%c0_47, %c0_48], %64 {strides = array<i32>} : memref<1x32xf32, #tpu.memory_space<vmem>>, vector<1x32xf32>,
    } else {
    }
    %c0 = arith.constant 0 : index
    %c0_1 = arith.constant 0 : index
    %c0_2 = arith.constant 0 : index
    %3 = vector.load %arg1[%c0, %c0_1, %c0_2] : memref<1x1x16xf32, #tpu.memory_space<vmem>>, vector<1x1x16xf32>
    %4 = vector.shape_cast %3 : vector<1x1x16xf32> to vector<1x16xf32>
    %c0_3 = arith.constant 0 : index
    %c0_4 = arith.constant 0 : index
    %5 = vector.load %arg16[%c0_3, %c0_4] : memref<1x32xf32, #tpu.memory_space<vmem>>, vector<1x32xf32>
    %c0_5 = arith.constant 0 : index
    %c0_6 = arith.constant 0 : index
    %6 = vector.load %arg17[%c0_5, %c0_6] : memref<1x32xf32, #tpu.memory_space<vmem>>, vector<1x32xf32>
    %c0_7 = arith.constant 0 : index
    %c0_8 = arith.constant 0 : index
    %7 = vector.load %arg4[%c0_7, %c0_8] : memref<8x32xf32, #tpu.memory_space<vmem>>, vector<8x32xf32>
    %c0_9 = arith.constant 0 : index
    %c0_10 = arith.constant 0 : index
    %8 = vector.load %arg6[%c0_9, %c0_10] : memref<32x32xf32, #tpu.memory_space<vmem>>, vector<32x32xf32>
    %cst = arith.constant dense<0.000000e+00> : vector<1x32xf32>
    %9 = tpu.matmul %5, %8, %cst {dimension_numbers = #tpu.dot_dimension_numbers<[1], [0], [0], [1], [0, 0, 1, 1], [], []>} : vector<1x32xf32>, vector<32x32xf32>, vector<1x32xf32> -> vector<1x32xf32>
    %c0_11 = arith.constant 0 : index
    %c0_12 = arith.constant 0 : index
    %10 = vector.load %arg5[%c0_11, %c0_12] : memref<8x32xf32, #tpu.memory_space<vmem>>, vector<8x32xf32>
    %11 = vector.broadcast %9 : vector<1x32xf32> to vector<8x32xf32>
    %12 = arith.addf %11, %10 : vector<8x32xf32>
    %13 = math.tanh %12 : vector<8x32xf32>
    %c0_13 = arith.constant 0 : index
    %c0_14 = arith.constant 0 : index
    %14 = vector.load %arg7[%c0_13, %c0_14] : memref<1x32xf32, #tpu.memory_space<vmem>>, vector<1x32xf32>
    %cst_15 = arith.constant dense<0.000000e+00> : vector<1x8xf32>
    %15 = tpu.matmul %14, %13, %cst_15 {dimension_numbers = #tpu.dot_dimension_numbers<[1], [1], [0], [0], [0, 0, 1, 0], [], []>} : vector<1x32xf32>, vector<8x32xf32>, vector<1x8xf32> -> vector<1x8xf32>
    %cst_16 = arith.constant dense<0xFF800000> : vector<1xf32>
    %16 = vector.multi_reduction <maximumf>, %15, %cst_16 [1] : vector<1x8xf32> to vector<1xf32>
    %17 = vector.shape_cast %16 : vector<1xf32> to vector<1x1xf32>
    %18 = vector.broadcast %17 : vector<1x1xf32> to vector<1x8xf32>
    %19 = arith.subf %15, %18 : vector<1x8xf32>
    %20 = math.exp %19 : vector<1x8xf32>
    %cst_17 = arith.constant dense<0.000000e+00> : vector<1xf32>
    %21 = vector.multi_reduction <add>, %20, %cst_17 [1] : vector<1x8xf32> to vector<1xf32>
    %22 = vector.shape_cast %21 : vector<1xf32> to vector<1x1xf32>
    %23 = tpu.reciprocal %22 {approx = true} : vector<1x1xf32> -> vector<1x1xf32>
    %24 = vector.broadcast %23 : vector<1x1xf32> to vector<1x8xf32>
    %25 = arith.mulf %20, %24 : vector<1x8xf32>
    %c0_18 = arith.constant 0 : index
    %c0_19 = arith.constant 0 : index
    %c0_20 = arith.constant 0 : index
    %26 = vector.load %arg13[%c0_18, %c0_19, %c0_20] : memref<1x1x8xf32, #tpu.memory_space<vmem>>, vector<1x1x8xf32>
    %27 = vector.shape_cast %26 : vector<1x1x8xf32> to vector<1x8xf32>
    %28 = vector.shape_cast %25 : vector<1x8xf32> to vector<1x1x8xf32>
    tpu.vector_store %arg13[%c0_18, %c0_19, %c0_20], %28 {strides = array<i32>} : memref<1x1x8xf32, #tpu.memory_space<vmem>>, vector<1x1x8xf32>,
    %cst_21 = arith.constant dense<0.000000e+00> : vector<1x32xf32>
    %29 = tpu.matmul %25, %7, %cst_21 {dimension_numbers = #tpu.dot_dimension_numbers<[1], [0], [0], [1], [0, 0, 1, 1], [], []>} : vector<1x8xf32>, vector<8x32xf32>, vector<1x32xf32> -> vector<1x32xf32>
    %30 = tpu.concatenate %4, %29, %5 in 1 : vector<1x16xf32>, vector<1x32xf32>, vector<1x32xf32> -> vector<1x80xf32>
    %c0_22 = arith.constant 0 : index
    %c0_23 = arith.constant 0 : index
    %31 = vector.load %arg8[%c0_22, %c0_23] : memref<80x128xf32, #tpu.memory_space<vmem>>, vector<80x128xf32>
    %cst_24 = arith.constant dense<0.000000e+00> : vector<1x128xf32>
    %32 = tpu.matmul %30, %31, %cst_24 {dimension_numbers = #tpu.dot_dimension_numbers<[1], [0], [0], [1], [0, 0, 1, 1], [], []>} : vector<1x80xf32>, vector<80x128xf32>, vector<1x128xf32> -> vector<1x128xf32>
    %c0_25 = arith.constant 0 : index
    %c0_26 = arith.constant 0 : index
    %33 = vector.load %arg9[%c0_25, %c0_26] : memref<1x128xf32, #tpu.memory_space<vmem>>, vector<1x128xf32>
    %34 = arith.addf %32, %33 : vector<1x128xf32>
    %35 = arith.negf %34 : vector<1x128xf32>
    %36 = math.exp %35 : vector<1x128xf32>
    %cst_27 = arith.constant 1.000000e+00 : f32
    %37 = vector.broadcast %cst_27 : f32 to vector<1x128xf32>
    %38 = arith.addf %37, %36 : vector<1x128xf32>
    %39 = arith.divf %37, %38 : vector<1x128xf32>
    %40 = math.tanh %34 : vector<1x128xf32>
    %41 = vector.extract_strided_slice %39 {offsets = [0, 0], sizes = [1, 32], strides = [1, 1]} : vector<1x128xf32> to vector<1x32xf32>
    %42 = vector.extract_strided_slice %39 {offsets = [0, 32], sizes = [1, 32], strides = [1, 1]} : vector<1x128xf32> to vector<1x32xf32>
    %43 = vector.extract_strided_slice %40 {offsets = [0, 64], sizes = [1, 32], strides = [1, 1]} : vector<1x128xf32> to vector<1x32xf32>
    %44 = vector.extract_strided_slice %39 {offsets = [0, 96], sizes = [1, 32], strides = [1, 1]} : vector<1x128xf32> to vector<1x32xf32>
    %45 = arith.mulf %42, %6 : vector<1x32xf32>
    %46 = arith.mulf %41, %43 : vector<1x32xf32>
    %47 = arith.addf %45, %46 : vector<1x32xf32>
    %48 = math.tanh %47 : vector<1x32xf32>
    %49 = arith.mulf %44, %48 : vector<1x32xf32>
    %c0_28 = arith.constant 0 : index
    %c0_29 = arith.constant 0 : index
    %50 = vector.load %arg16[%c0_28, %c0_29] : memref<1x32xf32, #tpu.memory_space<vmem>>, vector<1x32xf32>
    tpu.vector_store %arg16[%c0_28, %c0_29], %49 {strides = array<i32>} : memref<1x32xf32, #tpu.memory_space<vmem>>, vector<1x32xf32>,
    %c0_30 = arith.constant 0 : index
    %c0_31 = arith.constant 0 : index
    %51 = vector.load %arg17[%c0_30, %c0_31] : memref<1x32xf32, #tpu.memory_space<vmem>>, vector<1x32xf32>
    tpu.vector_store %arg17[%c0_30, %c0_31], %47 {strides = array<i32>} : memref<1x32xf32, #tpu.memory_space<vmem>>, vector<1x32xf32>,
    %c0_32 = arith.constant 0 : index
    %c0_33 = arith.constant 0 : index
    %52 = vector.load %arg10[%c0_32, %c0_33] : memref<32x16xf32, #tpu.memory_space<vmem>>, vector<32x16xf32>
    %cst_34 = arith.constant dense<0.000000e+00> : vector<1x16xf32>
    %53 = tpu.matmul %49, %52, %cst_34 {dimension_numbers = #tpu.dot_dimension_numbers<[1], [0], [0], [1], [0, 0, 1, 1], [], []>} : vector<1x32xf32>, vector<32x16xf32>, vector<1x16xf32> -> vector<1x16xf32>
    %c0_35 = arith.constant 0 : index
    %c0_36 = arith.constant 0 : index
    %54 = vector.load %arg11[%c0_35, %c0_36] : memref<1x16xf32, #tpu.memory_space<vmem>>, vector<1x16xf32>
    %55 = arith.addf %53, %54 : vector<1x16xf32>
    %c0_37 = arith.constant 0 : index
    %c0_38 = arith.constant 0 : index
    %c0_39 = arith.constant 0 : index
    %56 = vector.load %arg12[%c0_37, %c0_38, %c0_39] : memref<1x1x16xf32, #tpu.memory_space<vmem>>, vector<1x1x16xf32>
    %57 = vector.shape_cast %56 : vector<1x1x16xf32> to vector<1x16xf32>
    %58 = vector.shape_cast %55 : vector<1x16xf32> to vector<1x1x16xf32>
    tpu.vector_store %arg12[%c0_37, %c0_38, %c0_39], %58 {strides = array<i32>} : memref<1x1x16xf32, #tpu.memory_space<vmem>>, vector<1x1x16xf32>,
    %c5_i32 = arith.constant 5 : i32
    %59 = arith.cmpi eq, %arg0, %c5_i32 : i32
    %60 = arith.extui %59 : i1 to i32
    %c0_i32_40 = arith.constant 0 : i32
    %61 = arith.cmpi ne, %60, %c0_i32_40 : i32
    scf.if %61 {
      %c0_41 = arith.constant 0 : index
      %c0_42 = arith.constant 0 : index
      %62 = vector.load %arg14[%c0_41, %c0_42] : memref<1x32xf32, #tpu.memory_space<vmem>>, vector<1x32xf32>
      tpu.vector_store %arg14[%c0_41, %c0_42], %49 {strides = array<i32>} : memref<1x32xf32, #tpu.memory_space<vmem>>, vector<1x32xf32>,
      %c0_43 = arith.constant 0 : index
      %c0_44 = arith.constant 0 : index
      %63 = vector.load %arg15[%c0_43, %c0_44] : memref<1x32xf32, #tpu.memory_space<vmem>>, vector<1x32xf32>
      tpu.vector_store %arg15[%c0_43, %c0_44], %47 {strides = array<i32>} : memref<1x32xf32, #tpu.memory_space<vmem>>, vector<1x32xf32>,
    } else {
    }
    return
  }
  func.func @transform_0(%arg0: i32) -> (i32, i32, i32) {
    %c0_i32 = arith.constant 0 : i32
    %c0_i32_0 = arith.constant 0 : i32
    %c0_i32_1 = arith.constant 0 : i32
    return %arg0, %c0_i32, %c0_i32_0 : i32, i32, i32
  }
  func.func @transform_1(%arg0: i32) -> (i32, i32) {
    %c0_i32 = arith.constant 0 : i32
    %c0_i32_0 = arith.constant 0 : i32
    %c0_i32_1 = arith.constant 0 : i32
    return %c0_i32, %c0_i32_0 : i32, i32
  }
  func.func @transform_2(%arg0: i32) -> (i32, i32) {
    %c0_i32 = arith.constant 0 : i32
    %c0_i32_0 = arith.constant 0 : i32
    %c0_i32_1 = arith.constant 0 : i32
    return %c0_i32, %c0_i32_0 : i32, i32
  }
  func.func @transform_3(%arg0: i32) -> (i32, i32) {
    %c0_i32 = arith.constant 0 : i32
    %c0_i32_0 = arith.constant 0 : i32
    %c0_i32_1 = arith.constant 0 : i32
    return %c0_i32, %c0_i32_0 : i32, i32
  }
  func.func @transform_4(%arg0: i32) -> (i32, i32) {
    %c0_i32 = arith.constant 0 : i32
    %c0_i32_0 = arith.constant 0 : i32
    %c0_i32_1 = arith.constant 0 : i32
    return %c0_i32, %c0_i32_0 : i32, i32
  }
  func.func @transform_5(%arg0: i32) -> (i32, i32) {
    %c0_i32 = arith.constant 0 : i32
    %c0_i32_0 = arith.constant 0 : i32
    %c0_i32_1 = arith.constant 0 : i32
    return %c0_i32, %c0_i32_0 : i32, i32
  }
  func.func @transform_6(%arg0: i32) -> (i32, i32) {
    %c0_i32 = arith.constant 0 : i32
    %c0_i32_0 = arith.constant 0 : i32
    %c0_i32_1 = arith.constant 0 : i32
    return %c0_i32, %c0_i32_0 : i32, i32
  }
  func.func @transform_7(%arg0: i32) -> (i32, i32) {
    %c0_i32 = arith.constant 0 : i32
    %c0_i32_0 = arith.constant 0 : i32
    %c0_i32_1 = arith.constant 0 : i32
    return %c0_i32, %c0_i32_0 : i32, i32
  }
  func.func @transform_8(%arg0: i32) -> (i32, i32) {
    %c0_i32 = arith.constant 0 : i32
    %c0_i32_0 = arith.constant 0 : i32
    %c0_i32_1 = arith.constant 0 : i32
    return %c0_i32, %c0_i32_0 : i32, i32
  }
  func.func @transform_9(%arg0: i32) -> (i32, i32) {
    %c0_i32 = arith.constant 0 : i32
    %c0_i32_0 = arith.constant 0 : i32
    %c0_i32_1 = arith.constant 0 : i32
    return %c0_i32, %c0_i32_0 : i32, i32
  }
  func.func @transform_10(%arg0: i32) -> (i32, i32) {
    %c0_i32 = arith.constant 0 : i32
    %c0_i32_0 = arith.constant 0 : i32
    %c0_i32_1 = arith.constant 0 : i32
    return %c0_i32, %c0_i32_0 : i32, i32
  }
  func.func @transform_11(%arg0: i32) -> (i32, i32, i32) {
    %c0_i32 = arith.constant 0 : i32
    %c0_i32_0 = arith.constant 0 : i32
    %c0_i32_1 = arith.constant 0 : i32
    return %arg0, %c0_i32, %c0_i32_0 : i32, i32, i32
  }
  func.func @transform_12(%arg0: i32) -> (i32, i32, i32) {
    %c0_i32 = arith.constant 0 : i32
    %c0_i32_0 = arith.constant 0 : i32
    %c0_i32_1 = arith.constant 0 : i32
    return %arg0, %c0_i32, %c0_i32_0 : i32, i32, i32
  }
  func.func @transform_13(%arg0: i32) -> (i32, i32) {
    %c0_i32 = arith.constant 0 : i32
    %c0_i32_0 = arith.constant 0 : i32
    %c0_i32_1 = arith.constant 0 : i32
    return %c0_i32, %c0_i32_0 : i32, i32
  }
  func.func @transform_14(%arg0: i32) -> (i32, i32) {
    %c0_i32 = arith.constant 0 : i32
    %c0_i32_0 = arith.constant 0 : i32
    %c0_i32_1 = arith.constant 0 : i32
    return %c0_i32, %c0_i32_0 : i32, i32
  }
}

</mosaic_0001>

<llo_original>
// kernel: bahdanau_decoder_decode.1
$region0: #{bahdanau_decoder_decode.1}
  #allocation0 [shape = 'u32[]', space=smem, size = 0x4, offset = 0x4, fixed_abs, tag = 'smem constant byte address 0x4 - core index']
  #allocation1 [shape = 'u32[72,128]{1,0:T(1,128)}', space=vmem, size = 0x9000, scoped, tag = 'internal scratch']
  #allocation2 [shape = 'f32[1,32]{1,0:T(1,128)}', space=vmem, size = 0x200, scoped, tag = 'scratch operand']
  #allocation3 [shape = 'f32[1,32]{1,0:T(1,128)}', space=vmem, size = 0x200, scoped, tag = 'scratch operand']
  %s0 = inlined_call_operand.vmem [shape: f32[6,1,16], index: 0, kind: input, shape index: {}]
  %s1 = inlined_call_operand.vmem [shape: f32[1,32], index: 1, kind: input, shape index: {}]
  %s2 = inlined_call_operand.vmem [shape: f32[1,32], index: 2, kind: input, shape index: {}]
  %s3 = inlined_call_operand.vmem [shape: f32[8,32], index: 3, kind: input, shape index: {}]
  %s4 = inlined_call_operand.vmem [shape: f32[8,32], index: 4, kind: input, shape index: {}]
  %s5 = inlined_call_operand.hbm [shape: f32[32,32], index: 5, kind: input, shape index: {}]
  %s6 = inlined_call_operand.vmem [shape: f32[1,32], index: 6, kind: input, shape index: {}]
  %s7 = inlined_call_operand.vmem [shape: f32[80,128], index: 7, kind: input, shape index: {}]
  %s8 = inlined_call_operand.vmem [shape: f32[1,128], index: 8, kind: input, shape index: {}]
  %s9 = inlined_call_operand.vmem [shape: f32[32,16], index: 9, kind: input, shape index: {}]
  %s10 = inlined_call_operand.vmem [shape: f32[1,16], index: 10, kind: input, shape index: {}]
  %s11 = inlined_call_operand.vmem [shape: f32[6,1,16], index: 11, kind: output, shape index: {0}]
  %s12 = inlined_call_operand.vmem [shape: f32[6,1,8], index: 12, kind: output, shape index: {1}]
  %s13 = inlined_call_operand.hbm [shape: f32[1,32], index: 13, kind: output, shape index: {2}]
  %s14 = inlined_call_operand.hbm [shape: f32[1,32], index: 14, kind: output, shape index: {3}]
  %15 = xla_tuple %s11, %s12, %s13, %s14
  %s16 = sld [smem:[#allocation0]]
  $region113: #{bahdanau_decoder_decode.1} parent=0
    _
  %s18 = ssub.s32 1, %s16
  %s19 = scalar_select 0, %s18, %s16
  $region1: #{bahdanau_decoder_decode.1} parent=0
    #allocation4 [shape = 'u8[16384]{0}', space=vmem, size = 0x4000, scoped, tag = 'input window, operand 5, single buffered']
    #allocation5 [shape = 's32[2]{0}', space=sflag, size = 0x8, scoped, tag = 'scoped memory for bahdanau_decoder_decode.1']
    #allocation6 [shape = 's32[2]{0}', space=sflag, size = 0x8, scoped, tag = 'scoped memory for bahdanau_decoder_decode.1']
    #allocation7 [shape = 'u8[512]{0}', space=vmem, size = 0x400, scoped, tag = 'output window, operand 2, single buffered']
    #allocation8 [shape = 'u8[512]{0}', space=vmem, size = 0x400, scoped, tag = 'output window, operand 3, single buffered']
    #allocation9 [shape = 's32[1]{0}', space=sflag, size = 0x4, scoped, tag = 'scoped memory for bahdanau_decoder_decode.1']
    %20 = vsyncpa [#allocation5], 0
    %21 = vsyncpa [#allocation6], 0
    %22 = vsyncpa [#allocation9], 0
    loop: start=0, step=1, limit=8
    $region2: #{bahdanau_decoder_decode.1} parent=1 // loop_pre_header
      _
    $region3: #{bahdanau_decoder_decode.1} parent=1 // loop_header
      %s24 = sphi 0, %s28
      %p25 = scmp.ge.s32.totalorder %s24, 8
      %s34 = sphi 0, %s36
      %s37 = sphi 0, %s34
      %s38 = sphi 0, %s37
      %s54 = sphi 0, %s38
      %s58 = sphi 0, %s58
      %s60 = sphi 0, %s58
      %s61 = sphi 0, %s60
      %s75 = sphi 0, %s61
      %s79 = sphi 0, %s79
      %s81 = sphi 0, %s79
      %s82 = sphi 0, %s81
      %s96 = sphi 0, %s82
      %s100 = sphi 0, %s100
      %s102 = sphi 0, %s100
      %s103 = sphi 0, %s102
      %s117 = sphi 0, %s103
      %s121 = sphi 0, %s121
      %s123 = sphi 0, %s121
      %s124 = sphi 0, %s123
      %s138 = sphi 0, %s124
      %s142 = sphi 0, %s142
      %s144 = sphi 0, %s142
      %s145 = sphi 0, %s144
      %s159 = sphi 0, %s145
      %s163 = sphi 0, %s163
      %s165 = sphi 0, %s163
      %s166 = sphi 0, %s165
      %s180 = sphi 0, %s166
      %s184 = sphi 0, %s184
      %s186 = sphi 0, %s184
      %s187 = sphi 0, %s186
      %s201 = sphi 0, %s187
      %s205 = sphi 0, %s205
      %s207 = sphi 0, %s205
      %s208 = sphi 0, %s207
      %s222 = sphi 0, %s208
      %s226 = sphi 0, %s226
      %s228 = sphi 0, %s226
      %s229 = sphi 0, %s228
      %s243 = sphi 0, %s229
      %s247 = sphi 0, %s247
      %s249 = sphi 0, %s247
      %s250 = sphi 0, %s249
      %s264 = sphi 0, %s250
      %s270 = sphi 0, %s272
      %s273 = sphi 0, %s270
      %s274 = sphi 0, %s273
      %s290 = sphi 0, %s274
      %s296 = sphi 0, %s298
      %s299 = sphi 0, %s296
      %s300 = sphi 0, %s299
      %s316 = sphi 0, %s300
      %s320 = sphi 0, %s320
      %s322 = sphi 0, %s320
      %s323 = sphi 0, %s322
      %s337 = sphi 0, %s323
      %s341 = sphi 0, %s341
      %s343 = sphi 0, %s341
      %s344 = sphi 0, %s343
      %s358 = sphi 0, %s344
    $region4: #{bahdanau_decoder_decode.1} parent=1 // loop_header_branch
      %27 = sbr.rel (%p25) target = $region8
    $region5: #{bahdanau_decoder_decode.1} parent=1 // loop_body
      %s29 = ssub.s32 %s24, 1
      %s30 = ssub.s32 %s24, 2
      %s31 = sadd.s32 %s24, 1
      %s32 = ssub.s32 %s24, %s31
      %p33 = scmp.eq.s32.totalorder %s32, 0
      %s35 = sadd.s32 %s34, 1
      %s36 = scalar_select %p33, %s34, %s35
      %p39 = pneg %p33
      %p40 = scmp.eq.s32.totalorder %s24, 5
      %p41 = por %p39, %p40
      %p42 = scmp.ne.s32.totalorder %s34, %s37
      %p43 = scmp.eq.s32.totalorder %s24, 0
      %p44 = por %p42, %p43
      %p45 = scmp.ne.s32.totalorder %s34, %s37
      %p46 = scmp.eq.s32.totalorder %s29, 5
      %p47 = por %p45, %p46
      %p48 = scmp.ne.s32.totalorder %s37, %s38
      %p49 = scmp.eq.s32.totalorder %s29, 0
      %p50 = por %p48, %p49
      %p51 = scmp.ne.s32.totalorder %s37, %s38
      %p52 = scmp.eq.s32.totalorder %s30, 5
      %p53 = por %p51, %p52
      %p55 = scmp.ne.s32.totalorder %s38, %s54
      %p56 = scmp.eq.s32.totalorder %s30, 0
      %p57 = por %p55, %p56
      %s59 = sadd.s32 %s58, 1
      %p62 = scmp.eq.s32.totalorder %s24, 5
      %p63 = scmp.ne.s32.totalorder %s58, %s60
      %p64 = scmp.eq.s32.totalorder %s24, 0
      %p65 = por %p63, %p64
      %p66 = scmp.ne.s32.totalorder %s58, %s60
      %p67 = scmp.eq.s32.totalorder %s29, 5
      %p68 = por %p66, %p67
      %p69 = scmp.ne.s32.totalorder %s60, %s61
      %p70 = scmp.eq.s32.totalorder %s29, 0
      %p71 = por %p69, %p70
      %p72 = scmp.ne.s32.totalorder %s60, %s61
      %p73 = scmp.eq.s32.totalorder %s30, 5
      %p74 = por %p72, %p73
      %p76 = scmp.ne.s32.totalorder %s61, %s75
      %p77 = scmp.eq.s32.totalorder %s30, 0
      %p78 = por %p76, %p77
      %s80 = sadd.s32 %s79, 1
      %p83 = scmp.eq.s32.totalorder %s24, 5
      %p84 = scmp.ne.s32.totalorder %s79, %s81
      %p85 = scmp.eq.s32.totalorder %s24, 0
      %p86 = por %p84, %p85
      %p87 = scmp.ne.s32.totalorder %s79, %s81
      %p88 = scmp.eq.s32.totalorder %s29, 5
      %p89 = por %p87, %p88
      %p90 = scmp.ne.s32.totalorder %s81, %s82
      %p91 = scmp.eq.s32.totalorder %s29, 0
      %p92 = por %p90, %p91
      %p93 = scmp.ne.s32.totalorder %s81, %s82
      %p94 = scmp.eq.s32.totalorder %s30, 5
      %p95 = por %p93, %p94
      %p97 = scmp.ne.s32.totalorder %s82, %s96
      %p98 = scmp.eq.s32.totalorder %s30, 0
      %p99 = por %p97, %p98
      %s101 = sadd.s32 %s100, 1
      %p104 = scmp.eq.s32.totalorder %s24, 5
      %p105 = scmp.ne.s32.totalorder %s100, %s102
      %p106 = scmp.eq.s32.totalorder %s24, 0
      %p107 = por %p105, %p106
      %p108 = scmp.ne.s32.totalorder %s100, %s102
      %p109 = scmp.eq.s32.totalorder %s29, 5
      %p110 = por %p108, %p109
      %p111 = scmp.ne.s32.totalorder %s102, %s103
      %p112 = scmp.eq.s32.totalorder %s29, 0
      %p113 = por %p111, %p112
      %p114 = scmp.ne.s32.totalorder %s102, %s103
      %p115 = scmp.eq.s32.totalorder %s30, 5
      %p116 = por %p114, %p115
      %p118 = scmp.ne.s32.totalorder %s103, %s117
      %p119 = scmp.eq.s32.totalorder %s30, 0
      %p120 = por %p118, %p119
      %s122 = sadd.s32 %s121, 1
      %p125 = scmp.eq.s32.totalorder %s24, 5
      %p126 = scmp.ne.s32.totalorder %s121, %s123
      %p127 = scmp.eq.s32.totalorder %s24, 0
      %p128 = por %p126, %p127
      %p129 = scmp.ne.s32.totalorder %s121, %s123
      %p130 = scmp.eq.s32.totalorder %s29, 5
      %p131 = por %p129, %p130
      %p132 = scmp.ne.s32.totalorder %s123, %s124
      %p133 = scmp.eq.s32.totalorder %s29, 0
      %p134 = por %p132, %p133
      %p135 = scmp.ne.s32.totalorder %s123, %s124
      %p136 = scmp.eq.s32.totalorder %s30, 5
      %p137 = por %p135, %p136
      %p139 = scmp.ne.s32.totalorder %s124, %s138
      %p140 = scmp.eq.s32.totalorder %s30, 0
      %p141 = por %p139, %p140
      %s143 = sadd.s32 %s142, 1
      %p146 = scmp.eq.s32.totalorder %s24, 5
      %p147 = scmp.ne.s32.totalorder %s142, %s144
      %p148 = scmp.eq.s32.totalorder %s24, 0
      %p149 = por %p147, %p148
      %p150 = scmp.ne.s32.totalorder %s142, %s144
      %p151 = scmp.eq.s32.totalorder %s29, 5
      %p152 = por %p150, %p151
      %p153 = scmp.ne.s32.totalorder %s144, %s145
      %p154 = scmp.eq.s32.totalorder %s29, 0
      %p155 = por %p153, %p154
      %p156 = scmp.ne.s32.totalorder %s144, %s145
      %p157 = scmp.eq.s32.totalorder %s30, 5
      %p158 = por %p156, %p157
      %p160 = scmp.ne.s32.totalorder %s145, %s159
      %p161 = scmp.eq.s32.totalorder %s30, 0
      %p162 = por %p160, %p161
      %s164 = sadd.s32 %s163, 1
      %p167 = scmp.eq.s32.totalorder %s24, 5
      %p168 = scmp.ne.s32.totalorder %s163, %s165
      %p169 = scmp.eq.s32.totalorder %s24, 0
      %p170 = por %p168, %p169
      %p171 = scmp.ne.s32.totalorder %s163, %s165
      %p172 = scmp.eq.s32.totalorder %s29, 5
      %p173 = por %p171, %p172
      %p174 = scmp.ne.s32.totalorder %s165, %s166
      %p175 = scmp.eq.s32.totalorder %s29, 0
      %p176 = por %p174, %p175
      %p177 = scmp.ne.s32.totalorder %s165, %s166
      %p178 = scmp.eq.s32.totalorder %s30, 5
      %p179 = por %p177, %p178
      %p181 = scmp.ne.s32.totalorder %s166, %s180
      %p182 = scmp.eq.s32.totalorder %s30, 0
      %p183 = por %p181, %p182
      %s185 = sadd.s32 %s184, 1
      %p188 = scmp.eq.s32.totalorder %s24, 5
      %p189 = scmp.ne.s32.totalorder %s184, %s186
      %p190 = scmp.eq.s32.totalorder %s24, 0
      %p191 = por %p189, %p190
      %p192 = scmp.ne.s32.totalorder %s184, %s186
      %p193 = scmp.eq.s32.totalorder %s29, 5
      %p194 = por %p192, %p193
      %p195 = scmp.ne.s32.totalorder %s186, %s187
      %p196 = scmp.eq.s32.totalorder %s29, 0
      %p197 = por %p195, %p196
      %p198 = scmp.ne.s32.totalorder %s186, %s187
      %p199 = scmp.eq.s32.totalorder %s30, 5
      %p200 = por %p198, %p199
      %p202 = scmp.ne.s32.totalorder %s187, %s201
      %p203 = scmp.eq.s32.totalorder %s30, 0
      %p204 = por %p202, %p203
      %s206 = sadd.s32 %s205, 1
      %p209 = scmp.eq.s32.totalorder %s24, 5
      %p210 = scmp.ne.s32.totalorder %s205, %s207
      %p211 = scmp.eq.s32.totalorder %s24, 0
      %p212 = por %p210, %p211
      %p213 = scmp.ne.s32.totalorder %s205, %s207
      %p214 = scmp.eq.s32.totalorder %s29, 5
      %p215 = por %p213, %p214
      %p216 = scmp.ne.s32.totalorder %s207, %s208
      %p217 = scmp.eq.s32.totalorder %s29, 0
      %p218 = por %p216, %p217
      %p219 = scmp.ne.s32.totalorder %s207, %s208
      %p220 = scmp.eq.s32.totalorder %s30, 5
      %p221 = por %p219, %p220
      %p223 = scmp.ne.s32.totalorder %s208, %s222
      %p224 = scmp.eq.s32.totalorder %s30, 0
      %p225 = por %p223, %p224
      %s227 = sadd.s32 %s226, 1
      %p230 = scmp.eq.s32.totalorder %s24, 5
      %p231 = scmp.ne.s32.totalorder %s226, %s228
      %p232 = scmp.eq.s32.totalorder %s24, 0
      %p233 = por %p231, %p232
      %p234 = scmp.ne.s32.totalorder %s226, %s228
      %p235 = scmp.eq.s32.totalorder %s29, 5
      %p236 = por %p234, %p235
      %p237 = scmp.ne.s32.totalorder %s228, %s229
      %p238 = scmp.eq.s32.totalorder %s29, 0
      %p239 = por %p237, %p238
      %p240 = scmp.ne.s32.totalorder %s228, %s229
      %p241 = scmp.eq.s32.totalorder %s30, 5
      %p242 = por %p240, %p241
      %p244 = scmp.ne.s32.totalorder %s229, %s243
      %p245 = scmp.eq.s32.totalorder %s30, 0
      %p246 = por %p244, %p245
      %s248 = sadd.s32 %s247, 1
      %p251 = scmp.eq.s32.totalorder %s24, 5
      %p252 = scmp.ne.s32.totalorder %s247, %s249
      %p253 = scmp.eq.s32.totalorder %s24, 0
      %p254 = por %p252, %p253
      %p255 = scmp.ne.s32.totalorder %s247, %s249
      %p256 = scmp.eq.s32.totalorder %s29, 5
      %p257 = por %p255, %p256
      %p258 = scmp.ne.s32.totalorder %s249, %s250
      %p259 = scmp.eq.s32.totalorder %s29, 0
      %p260 = por %p258, %p259
      %p261 = scmp.ne.s32.totalorder %s249, %s250
      %p262 = scmp.eq.s32.totalorder %s30, 5
      %p263 = por %p261, %p262
      %p265 = scmp.ne.s32.totalorder %s250, %s264
      %p266 = scmp.eq.s32.totalorder %s30, 0
      %p267 = por %p265, %p266
      %s268 = ssub.s32 %s24, %s31
      %p269 = scmp.eq.s32.totalorder %s268, 0
      %s271 = sadd.s32 %s270, 1
      %s272 = scalar_select %p269, %s270, %s271
      %p275 = pneg %p269
      %p276 = scmp.eq.s32.totalorder %s24, 5
      %p277 = por %p275, %p276
      %p278 = scmp.ne.s32.totalorder %s270, %s273
      %p279 = scmp.eq.s32.totalorder %s24, 0
      %p280 = por %p278, %p279
      %p281 = scmp.ne.s32.totalorder %s270, %s273
      %p282 = scmp.eq.s32.totalorder %s29, 5
      %p283 = por %p281, %p282
      %p284 = scmp.ne.s32.totalorder %s273, %s274
      %p285 = scmp.eq.s32.totalorder %s29, 0
      %p286 = por %p284, %p285
      %p287 = scmp.ne.s32.totalorder %s273, %s274
      %p288 = scmp.eq.s32.totalorder %s30, 5
      %p289 = por %p287, %p288
      %p291 = scmp.ne.s32.totalorder %s274, %s290
      %p292 = scmp.eq.s32.totalorder %s30, 0
      %p293 = por %p291, %p292
      %s294 = ssub.s32 %s24, %s31
      %p295 = scmp.eq.s32.totalorder %s294, 0
      %s297 = sadd.s32 %s296, 1
      %s298 = scalar_select %p295, %s296, %s297
      %p301 = pneg %p295
      %p302 = scmp.eq.s32.totalorder %s24, 5
      %p303 = por %p301, %p302
      %p304 = scmp.ne.s32.totalorder %s296, %s299
      %p305 = scmp.eq.s32.totalorder %s24, 0
      %p306 = por %p304, %p305
      %p307 = scmp.ne.s32.totalorder %s296, %s299
      %p308 = scmp.eq.s32.totalorder %s29, 5
      %p309 = por %p307, %p308
      %p310 = scmp.ne.s32.totalorder %s299, %s300
      %p311 = scmp.eq.s32.totalorder %s29, 0
      %p312 = por %p310, %p311
      %p313 = scmp.ne.s32.totalorder %s299, %s300
      %p314 = scmp.eq.s32.totalorder %s30, 5
      %p315 = por %p313, %p314
      %p317 = scmp.ne.s32.totalorder %s300, %s316
      %p318 = scmp.eq.s32.totalorder %s30, 0
      %p319 = por %p317, %p318
      %s321 = sadd.s32 %s320, 1
      %p324 = scmp.eq.s32.totalorder %s24, 5
      %p325 = scmp.ne.s32.totalorder %s320, %s322
      %p326 = scmp.eq.s32.totalorder %s24, 0
      %p327 = por %p325, %p326
      %p328 = scmp.ne.s32.totalorder %s320, %s322
      %p329 = scmp.eq.s32.totalorder %s29, 5
      %p330 = por %p328, %p329
      %p331 = scmp.ne.s32.totalorder %s322, %s323
      %p332 = scmp.eq.s32.totalorder %s29, 0
      %p333 = por %p331, %p332
      %p334 = scmp.ne.s32.totalorder %s322, %s323
      %p335 = scmp.eq.s32.totalorder %s30, 5
      %p336 = por %p334, %p335
      %p338 = scmp.ne.s32.totalorder %s323, %s337
      %p339 = scmp.eq.s32.totalorder %s30, 0
      %p340 = por %p338, %p339
      %s342 = sadd.s32 %s341, 1
      %p345 = scmp.eq.s32.totalorder %s24, 5
      %p346 = scmp.ne.s32.totalorder %s341, %s343
      %p347 = scmp.eq.s32.totalorder %s24, 0
      %p348 = por %p346, %p347
      %p349 = scmp.ne.s32.totalorder %s341, %s343
      %p350 = scmp.eq.s32.totalorder %s29, 5
      %p351 = por %p349, %p350
      %p352 = scmp.ne.s32.totalorder %s343, %s344
      %p353 = scmp.eq.s32.totalorder %s29, 0
      %p354 = por %p352, %p353
      %p355 = scmp.ne.s32.totalorder %s343, %s344
      %p356 = scmp.eq.s32.totalorder %s30, 5
      %p357 = por %p355, %p356
      %p359 = scmp.ne.s32.totalorder %s344, %s358
      %p360 = scmp.eq.s32.totalorder %s30, 0
      %p361 = por %p359, %p360
      %p362 = scmp.le.s32.totalorder 1, %s24
      %p363 = scmp.lt.s32.totalorder %s24, 7
      %p364 = pnand %p362, %p363
      %p365 = pneg %p364
      // Predicated region
      $region9: #{bahdanau_decoder_decode.1} parent=5 // pred_check
        _
      $region10: #{bahdanau_decoder_decode.1} parent=5 // pred_check_branch
        %367 = sbr.rel (%p364) target = $region12
      $region11: #{bahdanau_decoder_decode.1} parent=5 // pred_region
        %s368 = ssub.s32 %s24, 1
        // Predicated region
        $region13: #{bahdanau_decoder_decode.1} parent=11 // pred_check
          %p369 = pneg %p71
        $region14: #{bahdanau_decoder_decode.1} parent=11 // pred_check_branch
          %371 = sbr.rel (%p369) target = $region16
        $region15: #{bahdanau_decoder_decode.1} parent=11 // pred_region
          _
        $region16: #{bahdanau_decoder_decode.1} parent=11 // pred_fallthru
          _
        // Predicated region
        $region17: #{bahdanau_decoder_decode.1} parent=11 // pred_check
          %p372 = pneg %p92
        $region18: #{bahdanau_decoder_decode.1} parent=11 // pred_check_branch
          %374 = sbr.rel (%p372) target = $region20
        $region19: #{bahdanau_decoder_decode.1} parent=11 // pred_region
          _
        $region20: #{bahdanau_decoder_decode.1} parent=11 // pred_fallthru
          _
        // Predicated region
        $region21: #{bahdanau_decoder_decode.1} parent=11 // pred_check
          %p375 = pneg %p113
        $region22: #{bahdanau_decoder_decode.1} parent=11 // pred_check_branch
          %377 = sbr.rel (%p375) target = $region24
        $region23: #{bahdanau_decoder_decode.1} parent=11 // pred_region
          _
        $region24: #{bahdanau_decoder_decode.1} parent=11 // pred_fallthru
          _
        // Predicated region
        $region25: #{bahdanau_decoder_decode.1} parent=11 // pred_check
          %p378 = pneg %p134
        $region26: #{bahdanau_decoder_decode.1} parent=11 // pred_check_branch
          %380 = sbr.rel (%p378) target = $region28
        $region27: #{bahdanau_decoder_decode.1} parent=11 // pred_region
          _
        $region28: #{bahdanau_decoder_decode.1} parent=11 // pred_fallthru
          _
        // Predicated region
        $region29: #{bahdanau_decoder_decode.1} parent=11 // pred_check
          %p381 = pneg %p155
        $region30: #{bahdanau_decoder_decode.1} parent=11 // pred_check_branch
          %383 = sbr.rel (%p381) target = $region32
        $region31: #{bahdanau_decoder_decode.1} parent=11 // pred_region
          %385 = vsyncadd [#allocation5], 0
          %s386 = sshll.u32 %s5, 4
          %s387 = int_to_ptr.hbm [resolvable:$true] %s386
          %s388 = sshll.u32 [#allocation4], 4
          %s389 = int_to_ptr.vmem [resolvable:$true] %s388
          %394 = dma.hbm_to_vmem [thread:$0]  %s387, 512, %s389, [#allocation5], 128, 128, 8
        $region32: #{bahdanau_decoder_decode.1} parent=11 // pred_fallthru
          _
        // Predicated region
        $region33: #{bahdanau_decoder_decode.1} parent=11 // pred_check
          %p395 = pneg %p176
        $region34: #{bahdanau_decoder_decode.1} parent=11 // pred_check_branch
          %397 = sbr.rel (%p395) target = $region36
        $region35: #{bahdanau_decoder_decode.1} parent=11 // pred_region
          _
        $region36: #{bahdanau_decoder_decode.1} parent=11 // pred_fallthru
          _
        // Predicated region
        $region37: #{bahdanau_decoder_decode.1} parent=11 // pred_check
          %p398 = pneg %p197
        $region38: #{bahdanau_decoder_decode.1} parent=11 // pred_check_branch
          %400 = sbr.rel (%p398) target = $region40
        $region39: #{bahdanau_decoder_decode.1} parent=11 // pred_region
          _
        $region40: #{bahdanau_decoder_decode.1} parent=11 // pred_fallthru
          _
        // Predicated region
        $region41: #{bahdanau_decoder_decode.1} parent=11 // pred_check
          %p401 = pneg %p218
        $region42: #{bahdanau_decoder_decode.1} parent=11 // pred_check_branch
          %403 = sbr.rel (%p401) target = $region44
        $region43: #{bahdanau_decoder_decode.1} parent=11 // pred_region
          _
        $region44: #{bahdanau_decoder_decode.1} parent=11 // pred_fallthru
          _
        // Predicated region
        $region45: #{bahdanau_decoder_decode.1} parent=11 // pred_check
          %p404 = pneg %p239
        $region46: #{bahdanau_decoder_decode.1} parent=11 // pred_check_branch
          %406 = sbr.rel (%p404) target = $region48
        $region47: #{bahdanau_decoder_decode.1} parent=11 // pred_region
          _
        $region48: #{bahdanau_decoder_decode.1} parent=11 // pred_fallthru
          _
        // Predicated region
        $region49: #{bahdanau_decoder_decode.1} parent=11 // pred_check
          %p407 = pneg %p260
        $region50: #{bahdanau_decoder_decode.1} parent=11 // pred_check_branch
          %409 = sbr.rel (%p407) target = $region52
        $region51: #{bahdanau_decoder_decode.1} parent=11 // pred_region
          _
        $region52: #{bahdanau_decoder_decode.1} parent=11 // pred_fallthru
          _
      $region12: #{bahdanau_decoder_decode.1} parent=5 // pred_fallthru
        _
      %p410 = scmp.lt.s32.totalorder %s24, 6
      // Predicated region
      $region53: #{bahdanau_decoder_decode.1} parent=5 // pred_check
        %p411 = pneg %p410
      $region54: #{bahdanau_decoder_decode.1} parent=5 // pred_check_branch
        %413 = sbr.rel (%p411) target = $region56
      $region55: #{bahdanau_decoder_decode.1} parent=5 // pred_region
        // Predicated region
        $region57: #{bahdanau_decoder_decode.1} parent=55 // pred_check
          %p414 = pneg %p44
        $region58: #{bahdanau_decoder_decode.1} parent=55 // pred_check_branch
          %416 = sbr.rel (%p414) target = $region60
        $region59: #{bahdanau_decoder_decode.1} parent=55 // pred_region
          %p417 = scmp.lt.s32.totalorder %s24, 5
          %s418 = scalar_select %p417, %s24, 5
          %s419 = scalar_lea.vmem %s0, %s418
        $region60: #{bahdanau_decoder_decode.1} parent=55 // pred_fallthru
          _
      $region56: #{bahdanau_decoder_decode.1} parent=5 // pred_fallthru
        _
      %p420 = scmp.le.s32.totalorder 1, %s24
      %p421 = scmp.lt.s32.totalorder %s24, 7
      %p422 = pnand %p420, %p421
      %p423 = pneg %p422
      // Predicated region
      $region61: #{bahdanau_decoder_decode.1} parent=5 // pred_check
        _
      $region62: #{bahdanau_decoder_decode.1} parent=5 // pred_check_branch
        %425 = sbr.rel (%p422) target = $region64
      $region63: #{bahdanau_decoder_decode.1} parent=5 // pred_region
        %s426 = ssub.s32 %s24, 1
        // Predicated region
        $region65: #{bahdanau_decoder_decode.1} parent=63 // pred_check
          %p427 = pneg %p155
        $region66: #{bahdanau_decoder_decode.1} parent=63 // pred_check_branch
          %429 = sbr.rel (%p427) target = $region68
        $region67: #{bahdanau_decoder_decode.1} parent=63 // pred_region
          %431 = dma.done [#allocation5], 512
        $region68: #{bahdanau_decoder_decode.1} parent=63 // pred_fallthru
          _
        %p432 = scmp.lt.s32.totalorder %s29, 5
        %s433 = scalar_select %p432, %s29, 5
        %s434 = scalar_lea.vmem %s0, %s433
        %p435 = pneg %p50
        %p436 = pneg %p47
        %p437 = pneg %p71
        %p438 = pneg %p68
        %p439 = pneg %p92
        %p440 = pneg %p89
        %p441 = pneg %p113
        %p442 = pneg %p110
        %p443 = pneg %p134
        %p444 = pneg %p131
        %p445 = pneg %p155
        %p446 = pneg %p152
        %p447 = pneg %p176
        %p448 = pneg %p173
        %p449 = pneg %p197
        %p450 = pneg %p194
        %p451 = pneg %p218
        %p452 = pneg %p215
        %p453 = pneg %p239
        %p454 = pneg %p236
        %p455 = pneg %p260
        %p456 = pneg %p257
        %p457 = pneg %p286
        %p458 = pneg %p283
        %p459 = scmp.lt.s32.totalorder %s29, 5
        %s460 = scalar_select %p459, %s29, 5
        %s461 = scalar_lea.vmem %s11, %s460
        %p462 = pneg %p312
        %p463 = pneg %p309
        %p464 = scmp.lt.s32.totalorder %s29, 5
        %s465 = scalar_select %p464, %s29, 5
        %s466 = scalar_lea.vmem %s12, %s465
        %p467 = pneg %p333
        %p468 = pneg %p330
        %p469 = pneg %p354
        %p470 = pneg %p351
        %p471 = scmp.lt.s32.totalorder %s29, 5
        %s472 = scalar_select %p471, %s29, 5
        %s473 = scalar_lea.vmem %s0, %s472
        %p474 = scmp.lt.s32.totalorder %s29, 5
        %s475 = scalar_select %p474, %s29, 5
        %s476 = scalar_lea.vmem %s11, %s475
        %p477 = scmp.lt.s32.totalorder %s29, 5
        %s478 = scalar_select %p477, %s29, 5
        %s479 = scalar_lea.vmem %s12, %s478
        %p480 = scmp.eq.s32.totalorder %s29, 0
        // Predicated region
        $region69: #{bahdanau_decoder_decode.1} parent=63 // pred_check
          %p481 = pneg %p480
        $region70: #{bahdanau_decoder_decode.1} parent=63 // pred_check_branch
          %483 = sbr.rel (%p481) target = $region72
        $region71: #{bahdanau_decoder_decode.1} parent=63 // pred_region
          %v484 = vld [vmem:[%s1] sm:$0x1]
          %vm485 = vcmask 253952
          %486 = vst.msk [vmem:[#allocation2] sm:$0x1] %vm485, %v484
          %v487 = vld [vmem:[%s2] sm:$0x1]
          %488 = vst.msk [vmem:[#allocation3] sm:$0x1] %vm485, %v487
        $region72: #{bahdanau_decoder_decode.1} parent=63 // pred_fallthru
          _
        %v489 = vld [vmem:[%s473] sm:$0x1]
        %v490 = vld [vmem:[#allocation2] sm:$0x1]
        %v491 = vld [vmem:[#allocation3] sm:$0x1]
        %v492 = vld [vmem:[%s3] sm:$0xff]
        %v493 = vld [vmem:[#allocation4] sm:$0xff]
        %v494 = vld [vmem:[#allocation4 + $0x8] sm:$0xff]
        %v495 = vld [vmem:[#allocation4 + $0x10] sm:$0xff]
        %v496 = vld [vmem:[#allocation4 + $0x18] sm:$0xff]
        %vm497 = vcmask 261120
        %v499 = vsel %vm497, %v490, 0
        %501 = vmatpush.msra.mxu0 0.0
        %502 = vmatpush.msra.mxu0 0.0
        %503 = vmatpush.msra.mxu0 0.0
        %504 = vmatpush.msra.mxu0 0.0
        %505 = vmatpush.msra.mxu0 0.0
        %506 = vmatpush.msra.mxu0 0.0
        %507 = vmatpush.msra.mxu0 0.0
        %508 = vmatpush.msra.mxu0 0.0
        %509 = vmatpush.msra.mxu0 0.0
        %510 = vmatpush.msra.mxu0 0.0
        %511 = vmatpush.msra.mxu0 0.0
        %512 = vmatpush.msra.mxu0 0.0
        %513 = vmatpush.msra.mxu0 %v496
        %514 = vmatpush.msra.mxu0 %v495
        %515 = vmatpush.msra.mxu0 %v494
        %516 = vmatpush.msra.mxu0 %v493
        %517 = vmatmul.f32.gmra.mxu0 %v499
        %v518 = vpop.f32.mrf.mxu0
        %v519 = vadd.f32 0.0, %v518
        %520 = vdwg.mxu0
        %v521 = vld [vmem:[%s4] sm:$0xff]
        %v522 = vperm.slane %v519, 0
        %v523 = vadd.f32 %v522, %v521
        %v524 = vtanh.pop %v523
        %v525 = vld [vmem:[%s6] sm:$0x1]
        %v527 = vsel %vm497, %v525, 0
        %v530 = vsel %vm497, %v524, 0
        %532 = vmatpush.xpose.msra.mxu0 0.0
        %533 = vmatpush.xpose.msra.mxu0 0.0
        %534 = vmatpush.xpose.msra.mxu0 0.0
        %535 = vmatpush.xpose.msra.mxu0 0.0
        %536 = vmatpush.xpose.msra.mxu0 0.0
        %537 = vmatpush.xpose.msra.mxu0 0.0
        %538 = vmatpush.xpose.msra.mxu0 0.0
        %539 = vmatpush.xpose.msra.mxu0 0.0
        %540 = vmatpush.xpose.msra.mxu0 0.0
        %541 = vmatpush.xpose.msra.mxu0 0.0
        %542 = vmatpush.xpose.msra.mxu0 0.0
        %543 = vmatpush.xpose.msra.mxu0 0.0
        %544 = vmatpush.xpose.msra.mxu0 0.0
        %545 = vmatpush.xpose.msra.mxu0 0.0
        %546 = vmatpush.xpose.msra.mxu0 0.0
        %547 = vmatpush.xpose.msra.mxu0 %v530
        %548 = vmatmul.f32.gmra.mxu0 %v527
        %v549 = vpop.f32.mrf.mxu0
        %v550 = vadd.f32 0.0, %v549
        %551 = vdwg.mxu0
        %vm552 = vcmask 57344
        %v553 = vsel %vm552, %v550, -inf
        %554 = vmax.xlane.f32.xlu0 %v553
        %v555 = vpop.xlane.xlu0 %554
        %v556 = vsub.f32 %v550, %v555
        %v557 = vmul.f32 %v556, 1.442695
        %v558 = vpow.pop %v557
        %v559 = vsel %vm552, %v558, 0.0
        %560 = vadd.xlane.f32.xlu0 %v559
        %v561 = vpop.xlane.xlu0 %560
        %v562 = vrcp.pop %v561
        %v563 = vmul.f32 %v558, %v562
        %564 = vst.msk [vmem:[%s479] sm:$0x1] %vm552, %v563
        %vm565 = vcmask 64512
        %v567 = vsel %vm565, %v563, 0
        %569 = vmatpush.msra.mxu0 0.0
        %570 = vmatpush.msra.mxu0 0.0
        %571 = vmatpush.msra.mxu0 0.0
        %572 = vmatpush.msra.mxu0 0.0
        %573 = vmatpush.msra.mxu0 0.0
        %574 = vmatpush.msra.mxu0 0.0
        %575 = vmatpush.msra.mxu0 0.0
        %576 = vmatpush.msra.mxu0 0.0
        %577 = vmatpush.msra.mxu0 0.0
        %578 = vmatpush.msra.mxu0 0.0
        %579 = vmatpush.msra.mxu0 0.0
        %580 = vmatpush.msra.mxu0 0.0
        %581 = vmatpush.msra.mxu0 0.0
        %582 = vmatpush.msra.mxu0 0.0
        %583 = vmatpush.msra.mxu0 0.0
        %584 = vmatpush.msra.mxu0 %v492
        %585 = vmatmul.f32.gmra.mxu0 %v567
        %v586 = vpop.f32.mrf.mxu0
        %v587 = vadd.f32 0.0, %v586
        %588 = vdwg.mxu0
        %590 = vrot.lane.b32.xlu0 %v587, 16
        %v591 = vpop.permute.xlu0 %590
        %v593 = vperm.slane %v490, 0
        %594 = vrot.lane.b32.xlu0 %v593, 48
        %v595 = vpop.permute.xlu0 %594
        %vm597 = vcmask 130048
        %v598 = vsel %vm597, %v489, %v591
        %vm599 = vcmask 392192
        %v600 = vsel %vm599, %v598, %v595
        %v601 = vld [vmem:[%s7] sm:$0xff]
        %v602 = vld [vmem:[%s7 + $0x8] sm:$0xff]
        %v603 = vld [vmem:[%s7 + $0x10] sm:$0xff]
        %v604 = vld [vmem:[%s7 + $0x18] sm:$0xff]
        %v605 = vld [vmem:[%s7 + $0x20] sm:$0xff]
        %v606 = vld [vmem:[%s7 + $0x28] sm:$0xff]
        %v607 = vld [vmem:[%s7 + $0x30] sm:$0xff]
        %v608 = vld [vmem:[%s7 + $0x38] sm:$0xff]
        %v609 = vld [vmem:[%s7 + $0x40] sm:$0xff]
        %v610 = vld [vmem:[%s7 + $0x48] sm:$0xff]
        %v611 = vld [vmem:[%s8] sm:$0x1]
        %vm612 = vcmask 654336
        %v614 = vsel %vm612, %v600, 0
        %616 = vmatpush.msra.mxu0 0.0
        %617 = vmatpush.msra.mxu0 0.0
        %618 = vmatpush.msra.mxu0 0.0
        %619 = vmatpush.msra.mxu0 0.0
        %620 = vmatpush.msra.mxu0 0.0
        %621 = vmatpush.msra.mxu0 0.0
        %622 = vmatpush.msra.mxu0 %v610
        %623 = vmatpush.msra.mxu0 %v609
        %624 = vmatpush.msra.mxu0 %v608
        %625 = vmatpush.msra.mxu0 %v607
        %626 = vmatpush.msra.mxu0 %v606
        %627 = vmatpush.msra.mxu0 %v605
        %628 = vmatpush.msra.mxu0 %v604
        %629 = vmatpush.msra.mxu0 %v603
        %630 = vmatpush.msra.mxu0 %v602
        %631 = vmatpush.msra.mxu0 %v601
        %632 = vmatmul.f32.gmra.mxu0 %v614
        %v633 = vpop.f32.mrf.mxu0
        %v634 = vadd.f32 %v611, %v633
        %635 = vdwg.mxu0
        %v636 = vxor.u32 %v634, 2147483648
        %v637 = vmul.f32 %v636, 1.442695
        %v638 = vpow.pop %v637
        %v639 = vadd.f32 %v638, 1.0
        %v640 = vrcp.pop %v639
        %v641 = vmul.f32 %v639, %v640
        %v642 = vsub.f32 1.0, %v641
        %v643 = vmul.f32 %v640, %v642
        %v644 = vadd.f32 %v640, %v643
        %vm645 = vweird.f32 %v639
        %vm646 = vweird.f32 %v640
        %vm647 = vmor %vm645, %vm646
        %v648 = vsel %vm647, %v640, %v644
        %v649 = vand.u32 2147483647, %v639
        %vm650 = vcmp.eq.f32.partialorder %v649, 8.507059e+37
        %v651 = vand.u32 %v639, 2147483648
        %v652 = vor.u32 1.1754944e-38, %v651
        %v653 = vsel %vm650, %v652, %v648
        %v654 = vmul.f32 1.0, %v653
        %v655 = vtanh.pop %v634
        %v657 = vperm.slane %v491, 0
        %658 = vrot.lane.b32.xlu0 %v657, 32
        %v659 = vpop.permute.xlu0 %658
        %v661 = vmul.f32 %v654, %v659
        %663 = vrot.lane.b32.xlu0 %v655, 64
        %v664 = vpop.permute.xlu0 %663
        %v666 = vmul.f32 %v654, %v664
        %668 = vrot.lane.b32.xlu0 %v666, 32
        %v669 = vpop.permute.xlu0 %668
        %v671 = vadd.f32 %v661, %v669
        %v672 = vtanh.pop %v671
        %674 = vrot.lane.b32.xlu0 %v672, 64
        %v675 = vpop.permute.xlu0 %674
        %v677 = vmul.f32 %v654, %v675
        %679 = vrot.lane.b32.xlu0 %v677, 32
        %v680 = vpop.permute.xlu0 %679
        %vm682 = vcmask 253952
        %683 = vst.msk [vmem:[#allocation2] sm:$0x1] %vm682, %v680
        %685 = vrot.lane.b32.xlu0 %v671, 96
        %v686 = vpop.permute.xlu0 %685
        %688 = vst.msk [vmem:[#allocation3] sm:$0x1] %vm682, %v686
        %v689 = vld [vmem:[%s9] sm:$0xff]
        %v690 = vld [vmem:[%s9 + $0x8] sm:$0xff]
        %v691 = vld [vmem:[%s9 + $0x10] sm:$0xff]
        %v692 = vld [vmem:[%s9 + $0x18] sm:$0xff]
        %v693 = vld [vmem:[%s10] sm:$0x1]
        %v694 = vsel %vm497, %v680, 0
        %696 = vmatpush.msra.mxu0 0.0
        %697 = vmatpush.msra.mxu0 0.0
        %698 = vmatpush.msra.mxu0 0.0
        %699 = vmatpush.msra.mxu0 0.0
        %700 = vmatpush.msra.mxu0 0.0
        %701 = vmatpush.msra.mxu0 0.0
        %702 = vmatpush.msra.mxu0 0.0
        %703 = vmatpush.msra.mxu0 0.0
        %704 = vmatpush.msra.mxu0 0.0
        %705 = vmatpush.msra.mxu0 0.0
        %706 = vmatpush.msra.mxu0 0.0
        %707 = vmatpush.msra.mxu0 0.0
        %708 = vmatpush.msra.mxu0 %v692
        %709 = vmatpush.msra.mxu0 %v691
        %710 = vmatpush.msra.mxu0 %v690
        %711 = vmatpush.msra.mxu0 %v689
        %712 = vmatmul.f32.gmra.mxu0 %v694
        %v713 = vpop.f32.mrf.mxu0
        %v714 = vadd.f32 %v693, %v713
        %715 = vdwg.mxu0
        %vm716 = vcmask 122880
        %717 = vst.msk [vmem:[%s476] sm:$0x1] %vm716, %v714
        %p718 = scmp.eq.s32.totalorder %s29, 5
        // Predicated region
        $region73: #{bahdanau_decoder_decode.1} parent=63 // pred_check
          %p719 = pneg %p718
        $region74: #{bahdanau_decoder_decode.1} parent=63 // pred_check_branch
          %721 = sbr.rel (%p719) target = $region76
        $region75: #{bahdanau_decoder_decode.1} parent=63 // pred_region
          %722 = vst.msk [vmem:[#allocation7] sm:$0x1] %vm682, %v680
          %723 = vst.msk [vmem:[#allocation8] sm:$0x1] %vm682, %v686
        $region76: #{bahdanau_decoder_decode.1} parent=63 // pred_fallthru
          _
        %p724 = scmp.lt.s32.totalorder %s29, 5
        %s725 = scalar_select %p724, %s29, 5
        %s726 = scalar_lea.vmem %s11, %s725
        %p727 = scmp.lt.s32.totalorder %s29, 5
        %s728 = scalar_select %p727, %s29, 5
        %s729 = scalar_lea.vmem %s12, %s728
        // Predicated region
        $region77: #{bahdanau_decoder_decode.1} parent=63 // pred_check
          %p730 = pneg %p283
        $region78: #{bahdanau_decoder_decode.1} parent=63 // pred_check_branch
          %732 = sbr.rel (%p730) target = $region80
        $region79: #{bahdanau_decoder_decode.1} parent=63 // pred_region
          _
        $region80: #{bahdanau_decoder_decode.1} parent=63 // pred_fallthru
          _
        // Predicated region
        $region81: #{bahdanau_decoder_decode.1} parent=63 // pred_check
          %p733 = pneg %p309
        $region82: #{bahdanau_decoder_decode.1} parent=63 // pred_check_branch
          %735 = sbr.rel (%p733) target = $region84
        $region83: #{bahdanau_decoder_decode.1} parent=63 // pred_region
          _
        $region84: #{bahdanau_decoder_decode.1} parent=63 // pred_fallthru
          _
        // Predicated region
        $region85: #{bahdanau_decoder_decode.1} parent=63 // pred_check
          %p736 = pneg %p330
        $region86: #{bahdanau_decoder_decode.1} parent=63 // pred_check_branch
          %738 = sbr.rel (%p736) target = $region88
        $region87: #{bahdanau_decoder_decode.1} parent=63 // pred_region
          %740 = vsyncadd [#allocation6], 0
          %s742 = sshll.u32 [#allocation7], 4
          %s743 = int_to_ptr.vmem [resolvable:$true] %s742
          %s744 = sshll.u32 %s13, 4
          %s745 = int_to_ptr.hbm [resolvable:$true] %s744
          %747 = dma.vmem_to_hbm [thread:$0]  %s743, 16, %s745, [#allocation6]
        $region88: #{bahdanau_decoder_decode.1} parent=63 // pred_fallthru
          _
        // Predicated region
        $region89: #{bahdanau_decoder_decode.1} parent=63 // pred_check
          %p748 = pneg %p351
        $region90: #{bahdanau_decoder_decode.1} parent=63 // pred_check_branch
          %750 = sbr.rel (%p748) target = $region92
        $region91: #{bahdanau_decoder_decode.1} parent=63 // pred_region
          %752 = vsyncadd [#allocation9], 0
          %s754 = sshll.u32 [#allocation8], 4
          %s755 = int_to_ptr.vmem [resolvable:$true] %s754
          %s756 = sshll.u32 %s14, 4
          %s757 = int_to_ptr.hbm [resolvable:$true] %s756
          %759 = dma.vmem_to_hbm [thread:$0]  %s755, 16, %s757, [#allocation9]
        $region92: #{bahdanau_decoder_decode.1} parent=63 // pred_fallthru
          _
        // Predicated region
        $region93: #{bahdanau_decoder_decode.1} parent=63 // pred_check
          %p760 = pneg %p330
        $region94: #{bahdanau_decoder_decode.1} parent=63 // pred_check_branch
          %762 = sbr.rel (%p760) target = $region96
        $region95: #{bahdanau_decoder_decode.1} parent=63 // pred_region
          %764 = dma.done [#allocation6], 16
        $region96: #{bahdanau_decoder_decode.1} parent=63 // pred_fallthru
          _
        // Predicated region
        $region97: #{bahdanau_decoder_decode.1} parent=63 // pred_check
          %p765 = pneg %p351
        $region98: #{bahdanau_decoder_decode.1} parent=63 // pred_check_branch
          %767 = sbr.rel (%p765) target = $region100
        $region99: #{bahdanau_decoder_decode.1} parent=63 // pred_region
          %769 = dma.done [#allocation9], 16
        $region100: #{bahdanau_decoder_decode.1} parent=63 // pred_fallthru
          _
      $region64: #{bahdanau_decoder_decode.1} parent=5 // pred_fallthru
        _
      %p770 = scmp.le.s32.totalorder 2, %s24
      // Predicated region
      $region101: #{bahdanau_decoder_decode.1} parent=5 // pred_check
        %p771 = pneg %p770
      $region102: #{bahdanau_decoder_decode.1} parent=5 // pred_check_branch
        %773 = sbr.rel (%p771) target = $region104
      $region103: #{bahdanau_decoder_decode.1} parent=5 // pred_region
        %s774 = ssub.s32 %s24, 2
        // Predicated region
        $region105: #{bahdanau_decoder_decode.1} parent=103 // pred_check
          %p775 = pneg %p289
        $region106: #{bahdanau_decoder_decode.1} parent=103 // pred_check_branch
          %777 = sbr.rel (%p775) target = $region108
        $region107: #{bahdanau_decoder_decode.1} parent=103 // pred_region
          %p778 = scmp.lt.s32.totalorder %s30, 5
          %s779 = scalar_select %p778, %s30, 5
          %s780 = scalar_lea.vmem %s11, %s779
        $region108: #{bahdanau_decoder_decode.1} parent=103 // pred_fallthru
          _
        // Predicated region
        $region109: #{bahdanau_decoder_decode.1} parent=103 // pred_check
          %p781 = pneg %p315
        $region110: #{bahdanau_decoder_decode.1} parent=103 // pred_check_branch
          %783 = sbr.rel (%p781) target = $region112
        $region111: #{bahdanau_decoder_decode.1} parent=103 // pred_region
          %p784 = scmp.lt.s32.totalorder %s30, 5
          %s785 = scalar_select %p784, %s30, 5
          %s786 = scalar_lea.vmem %s12, %s785
        $region112: #{bahdanau_decoder_decode.1} parent=103 // pred_fallthru
          _
      $region104: #{bahdanau_decoder_decode.1} parent=5 // pred_fallthru
        _
    $region6: #{bahdanau_decoder_decode.1} parent=1 // loop_footer
      %s28 = sadd.s32 1, %s24
    $region7: #{bahdanau_decoder_decode.1} parent=1 // loop_footer_branch
      %23 = sbr.rel target = $region3
    $region8: #{bahdanau_decoder_decode.1} parent=1 // loop_exit
      _
    %787 = vsyncpa [#allocation5], 1
    %s788 = scalar_lea.sflag [#allocation5], 1
    %789 = vsyncpa %s788, 1
    %790 = vsyncpa [#allocation6], 1
    %s791 = scalar_lea.sflag [#allocation6], 1
    %792 = vsyncpa %s791, 1
    %793 = vsyncpa [#allocation9], 1

</llo_original>
